<compile_context>
chip_gen: v5e
topology: v5e:2x2
jax: 0.10.0
libtpu: 0.0.40
codegen_flags: <defaults>
</compile_context>

<pallas_src>
import functools

import jax
import jax.numpy as jnp
from jax.experimental import pallas as pl
from jax.experimental.pallas import tpu as pltpu


def _layernorm_kernel(x_ref, w_ref, b_ref, o_ref, *, eps: float, features: int):
    x = x_ref[...].astype(jnp.float32)            # (tile_rows, F)
    w = w_ref[...].astype(jnp.float32)            # (1, F)
    b = b_ref[...].astype(jnp.float32)            # (1, F)

    mean = jnp.mean(x, axis=-1, keepdims=True)    # (tile_rows, 1)
    centered = x - mean
    # torch.Tensor.std defaults to the unbiased estimator (divide by N-1).
    var_unbiased = jnp.sum(centered * centered, axis=-1, keepdims=True) / (features - 1)
    std = jnp.sqrt(var_unbiased)

    # Exact per-row reciprocal (keeps 1e-5 tolerance), then broadcast-multiply:
    # tile_rows divides instead of tile_rows*F divides.
    inv = 1.0 / (eps + std)                       # (tile_rows, 1)
    y = (centered * inv) * w + b
    o_ref[...] = y.astype(o_ref.dtype)


def _round_up(n: int, m: int) -> int:
    return (n + m - 1) // m * m


def _choose_tile_rows(rows: int, features: int, itemsize: int,
                      vmem_budget_bytes: int = 40 << 20) -> int:
    """Pick a row-tile that keeps the double-buffered working set within budget."""
    # Sublane packing of the storage dtype: 8 rows for f32, 16 for bf16, 32 for 8-bit.
    sub = 8 * max(1, 4 // itemsize)
    # Per-row VMEM footprint: double-buffered (in + out) pipeline tiles in the
    # storage dtype plus ~3 f32-sized intermediates inside the kernel body.
    bytes_per_row = features * (4 * itemsize + 3 * 4)
    max_rows = max(sub, vmem_budget_bytes // max(bytes_per_row, 1))
    tile = min(max_rows, 1024, _round_up(rows, sub))
    tile = max(sub, (tile // sub) * sub)
    return tile


def layer_norm_pallas(x, w, b, eps: float = 1e-05, tile_rows: int | None = None):
    """x: (..., F); w, b: (F,). Returns same shape/dtype as x."""
    orig_shape = x.shape
    features = orig_shape[-1]
    rows = 1
    for d in orig_shape[:-1]:
        rows *= d

    x2 = x.reshape(rows, features)
    w2 = w.reshape(1, features)
    b2 = b.reshape(1, features)

    itemsize = jnp.dtype(x.dtype).itemsize
    if tile_rows is None:
        tile_rows = _choose_tile_rows(rows, features, itemsize)

    # No padding / slicing in the wrapper: Pallas masks the out-of-bounds rows
    # of the partial last block, and each output row depends only on its own
    # input row, so garbage in the over-read region never contaminates results.
    grid = (pl.cdiv(rows, tile_rows),)

    kernel = functools.partial(_layernorm_kernel, eps=eps, features=features)

    out = pl.pallas_call(
        kernel,
        out_shape=jax.ShapeDtypeStruct((rows, features), x.dtype),
        grid_spec=pltpu.PrefetchScalarGridSpec(
            num_scalar_prefetch=0,
            grid=grid,
            in_specs=[
                pl.BlockSpec((tile_rows, features), lambda i: (i, 0)),
                pl.BlockSpec((1, features), lambda i: (0, 0)),
                pl.BlockSpec((1, features), lambda i: (0, 0)),
            ],
            out_specs=pl.BlockSpec((tile_rows, features), lambda i: (i, 0)),
        ),
        compiler_params=pltpu.CompilerParams(
            dimension_semantics=("parallel",),
            # Above the default scoped limit (16 MiB v5e / 32 MiB v6e-v7x) so the
            # large tiles compile, yet under v7x's 64 MiB physical VMEM.
            vmem_limit_bytes=48 << 20,
        ),
    )(x2, w2, b2)

    return out.reshape(orig_shape)


if __name__ == "__main__":
    # Shapes implied by the module: normalize over the last ("row") dim.
    batch, seq, hidden = 2, 8, 32

    key = jax.random.PRNGKey(0)
    x = jax.random.normal(key, (batch, seq, hidden), dtype=jnp.float32)

    # Deterministic parameter init matching nn.Parameter(torch.ones/zeros(features)).
    w = jnp.ones((hidden,), dtype=jnp.float32)
    b = jnp.zeros((hidden,), dtype=jnp.float32)

    y = layer_norm_pallas(x, w, b, eps=1e-05)
    jax.block_until_ready(y)

    # Pure-JAX reference check (same semantics as the PyTorch forward:
    # unbiased std, eps + std in the denominator).
    mean = jnp.mean(x, axis=-1, keepdims=True)
    std = jnp.sqrt(jnp.sum((x - mean) ** 2, axis=-1, keepdims=True) / (hidden - 1))
    ref = w * (x - mean) / (1e-05 + std) + b
    assert jnp.allclose(y, ref, atol=1e-5, rtol=1e-5), "mismatch vs reference"

    print("KERNEL_OK")
</pallas_src>

<mosaic_0001>
module attributes {stable_mosaic.version = 11 : i64} {
  func.func @_layernorm_kernel(%arg0: i32, %arg1: memref<16x32xf32, #tpu.memory_space<vmem>>, %arg2: memref<1x32xf32, #tpu.memory_space<vmem>>, %arg3: memref<1x32xf32, #tpu.memory_space<vmem>>, %arg4: memref<16x32xf32, #tpu.memory_space<vmem>>) attributes {dimension_semantics = [#tpu.dimension_semantics<parallel>], iteration_bounds = array<i64: 1>, scalar_prefetch = 0 : i64, scratch_operands = 0 : i64, tpu.core_type = #tpu.core_type<tc>, window_params = [{transform_indices = @transform_0, window_bounds = array<i64: 16, 32>}, {pipeline_mode = #tpu.pipeline_mode<synchronous>, transform_indices = @transform_1, window_bounds = array<i64: 1, 32>}, {pipeline_mode = #tpu.pipeline_mode<synchronous>, transform_indices = @transform_2, window_bounds = array<i64: 1, 32>}, {transform_indices = @transform_3, window_bounds = array<i64: 16, 32>}]} {
    %c0 = arith.constant 0 : index
    %c0_0 = arith.constant 0 : index
    %0 = vector.load %arg1[%c0, %c0_0] : memref<16x32xf32, #tpu.memory_space<vmem>>, vector<16x32xf32>
    %c0_1 = arith.constant 0 : index
    %c0_2 = arith.constant 0 : index
    %1 = vector.load %arg2[%c0_1, %c0_2] : memref<1x32xf32, #tpu.memory_space<vmem>>, vector<1x32xf32>
    %c0_3 = arith.constant 0 : index
    %c0_4 = arith.constant 0 : index
    %2 = vector.load %arg3[%c0_3, %c0_4] : memref<1x32xf32, #tpu.memory_space<vmem>>, vector<1x32xf32>
    %cst = arith.constant dense<0.000000e+00> : vector<16xf32>
    %3 = vector.multi_reduction <add>, %0, %cst [1] : vector<16x32xf32> to vector<16xf32>
    %4 = vector.shape_cast %3 : vector<16xf32> to vector<16x1xf32>
    %cst_5 = arith.constant 3.200000e+01 : f32
    %5 = vector.broadcast %cst_5 : f32 to vector<16x1xf32>
    %6 = arith.divf %4, %5 : vector<16x1xf32>
    %7 = vector.broadcast %6 : vector<16x1xf32> to vector<16x32xf32>
    %8 = arith.subf %0, %7 : vector<16x32xf32>
    %9 = arith.mulf %8, %8 : vector<16x32xf32>
    %cst_6 = arith.constant dense<0.000000e+00> : vector<16xf32>
    %10 = vector.multi_reduction <add>, %9, %cst_6 [1] : vector<16x32xf32> to vector<16xf32>
    %11 = vector.shape_cast %10 : vector<16xf32> to vector<16x1xf32>
    %cst_7 = arith.constant 3.100000e+01 : f32
    %12 = vector.broadcast %cst_7 : f32 to vector<16x1xf32>
    %13 = arith.divf %11, %12 : vector<16x1xf32>
    %14 = math.sqrt %13 : vector<16x1xf32>
    %cst_8 = arith.constant 9.99999974E-6 : f32
    %15 = vector.broadcast %cst_8 : f32 to vector<16x1xf32>
    %16 = arith.addf %15, %14 : vector<16x1xf32>
    %cst_9 = arith.constant 1.000000e+00 : f32
    %17 = vector.broadcast %cst_9 : f32 to vector<16x1xf32>
    %18 = arith.divf %17, %16 : vector<16x1xf32>
    %19 = vector.broadcast %18 : vector<16x1xf32> to vector<16x32xf32>
    %20 = arith.mulf %8, %19 : vector<16x32xf32>
    %21 = vector.broadcast %1 : vector<1x32xf32> to vector<16x32xf32>
    %22 = arith.mulf %20, %21 : vector<16x32xf32>
    %23 = vector.broadcast %2 : vector<1x32xf32> to vector<16x32xf32>
    %24 = arith.addf %22, %23 : vector<16x32xf32>
    %c0_10 = arith.constant 0 : index
    %c0_11 = arith.constant 0 : index
    %25 = vector.load %arg4[%c0_10, %c0_11] : memref<16x32xf32, #tpu.memory_space<vmem>>, vector<16x32xf32>
    tpu.vector_store %arg4[%c0_10, %c0_11], %24 {strides = array<i32>} : memref<16x32xf32, #tpu.memory_space<vmem>>, vector<16x32xf32>,
    return
  }
  func.func @transform_0(%arg0: i32) -> (i32, i32) {
    %c0_i32 = arith.constant 0 : i32
    %c0_i32_0 = arith.constant 0 : i32
    return %arg0, %c0_i32 : i32, i32
  }
  func.func @transform_1(%arg0: i32) -> (i32, i32) {
    %c0_i32 = arith.constant 0 : i32
    %c0_i32_0 = arith.constant 0 : i32
    %c0_i32_1 = arith.constant 0 : i32
    return %c0_i32, %c0_i32_0 : i32, i32
  }
  func.func @transform_2(%arg0: i32) -> (i32, i32) {
    %c0_i32 = arith.constant 0 : i32
    %c0_i32_0 = arith.constant 0 : i32
    %c0_i32_1 = arith.constant 0 : i32
    return %c0_i32, %c0_i32_0 : i32, i32
  }
  func.func @transform_3(%arg0: i32) -> (i32, i32) {
    %c0_i32 = arith.constant 0 : i32
    %c0_i32_0 = arith.constant 0 : i32
    return %arg0, %c0_i32 : i32, i32
  }
}

</mosaic_0001>

<llo_original>
// kernel: tpu_custom_call.1
$region0: #{tpu_custom_call.1}
  #allocation0 [shape = 'u32[]', space=smem, size = 0x4, offset = 0x4, fixed_abs, tag = 'smem constant byte address 0x4 - core index']
  #allocation1 [shape = 'u32[72,128]{1,0:T(1,128)}', space=vmem, size = 0x9000, scoped, tag = 'internal scratch']
  %s0 = inlined_call_operand.hbm [shape: f32[16,32], index: 0, kind: input, shape index: {}]
  %s1 = inlined_call_operand.hbm [shape: f32[1,32], index: 1, kind: input, shape index: {}]
  %s2 = inlined_call_operand.vmem [shape: f32[1,32], index: 2, kind: input, shape index: {}]
  %s3 = inlined_call_operand.hbm [shape: f32[16,32], index: 3, kind: output, shape index: {}]
  %s4 = sld [smem:[#allocation0]]
  $region30: #{tpu_custom_call.1} parent=0
    _
  %s6 = ssub.s32 1, %s4
  %s7 = scalar_select 0, %s6, %s4
  $region1: #{tpu_custom_call.1} parent=0
    #allocation2 [shape = 'u8[8192]{0}', space=vmem, size = 0x2000, scoped, tag = 'input window, operand 0, single buffered']
    #allocation3 [shape = 's32[1]{0}', space=sflag, size = 0x4, scoped, tag = 'scoped memory for tpu_custom_call.1']
    #allocation4 [shape = 's32[1]{0}', space=sflag, size = 0x4, scoped, tag = 'scoped memory for tpu_custom_call.1']
    #allocation5 [shape = 'u8[512]{0}', space=vmem, size = 0x400, scoped, tag = 'input window, operand 1, single buffered']
    #allocation6 [shape = 's32[1]{0}', space=sflag, size = 0x4, scoped, tag = 'scoped memory for tpu_custom_call.1']
    #allocation7 [shape = 'u8[8192]{0}', space=vmem, size = 0x2000, scoped, tag = 'output window, operand 0, single buffered']
    %8 = vsyncpa [#allocation3], 0
    %9 = vsyncpa [#allocation6], 0
    %10 = vsyncpa [#allocation4], 0
    // Predicated region
    $region2: #{tpu_custom_call.1} parent=1 // pred_check
      _
    $region3: #{tpu_custom_call.1} parent=1 // pred_check_branch
      %12 = sbr.rel (0) target = $region5
    $region4: #{tpu_custom_call.1} parent=1 // pred_region
      %14 = vsyncadd [#allocation3], 0
      %s15 = sshll.u32 %s0, 4
      %s16 = int_to_ptr.hbm [resolvable:$true] %s15
      %s17 = sshll.u32 [#allocation2], 4
      %s18 = int_to_ptr.vmem [resolvable:$true] %s17
      %23 = dma.hbm_to_vmem [thread:$0]  %s16, 256, %s18, [#allocation3], 128, 128, 8
    $region5: #{tpu_custom_call.1} parent=1 // pred_fallthru
      _
    // Predicated region
    $region6: #{tpu_custom_call.1} parent=1 // pred_check
      _
    $region7: #{tpu_custom_call.1} parent=1 // pred_check_branch
      %25 = sbr.rel (0) target = $region9
    $region8: #{tpu_custom_call.1} parent=1 // pred_region
      %27 = vsyncadd [#allocation6], 0
      %s29 = sshll.u32 %s1, 4
      %s30 = int_to_ptr.hbm [resolvable:$true] %s29
      %s31 = sshll.u32 [#allocation5], 4
      %s32 = int_to_ptr.vmem [resolvable:$true] %s31
      %34 = dma.hbm_to_vmem [thread:$0]  %s30, 16, %s32, [#allocation6]
    $region9: #{tpu_custom_call.1} parent=1 // pred_fallthru
      _
    // Predicated region
    $region10: #{tpu_custom_call.1} parent=1 // pred_check
      _
    $region11: #{tpu_custom_call.1} parent=1 // pred_check_branch
      %36 = sbr.rel (0) target = $region13
    $region12: #{tpu_custom_call.1} parent=1 // pred_region
      _
    $region13: #{tpu_custom_call.1} parent=1 // pred_fallthru
      _
    // Predicated region
    $region14: #{tpu_custom_call.1} parent=1 // pred_check
      _
    $region15: #{tpu_custom_call.1} parent=1 // pred_check_branch
      %38 = sbr.rel (0) target = $region17
    $region16: #{tpu_custom_call.1} parent=1 // pred_region
      %40 = dma.done [#allocation3], 256
    $region17: #{tpu_custom_call.1} parent=1 // pred_fallthru
      _
    // Predicated region
    $region18: #{tpu_custom_call.1} parent=1 // pred_check
      _
    $region19: #{tpu_custom_call.1} parent=1 // pred_check_branch
      %42 = sbr.rel (0) target = $region21
    $region20: #{tpu_custom_call.1} parent=1 // pred_region
      %44 = dma.done [#allocation6], 16
    $region21: #{tpu_custom_call.1} parent=1 // pred_fallthru
      _
    %v45 = vld [vmem:[#allocation2] sm:$0xff]
    %v46 = vld [vmem:[#allocation2 + $0x8] sm:$0xff]
    %v47 = vld [vmem:[#allocation5] sm:$0x1]
    %v48 = vld [vmem:[%s2] sm:$0x1]
    %vm49 = vcmask 261120
    %v50 = vsel %vm49, %v45, 0.0
    %51 = vadd.xlane.f32.xlu0 %v50
    %v52 = vpop.xlane.xlu0 %51
    %v53 = vsel %vm49, %v46, 0.0
    %54 = vadd.xlane.f32.xlu0 %v53
    %v55 = vpop.xlane.xlu0 %54
    %v56 = vrcp.pop 32.0
    %v57 = vmul.f32 32.0, %v56
    %v58 = vsub.f32 1.0, %v57
    %v59 = vmul.f32 %v56, %v58
    %v60 = vadd.f32 %v56, %v59
    %vm61 = vweird.f32 %v56
    %v62 = vsel %vm61, %v56, %v60
    %v63 = vmul.f32 %v52, %v62
    %v64 = vmul.f32 %v55, %v62
    %v65 = vsub.f32 %v45, %v63
    %v66 = vsub.f32 %v46, %v64
    %v67 = vmul.f32 %v65, %v65
    %v68 = vmul.f32 %v66, %v66
    %v69 = vsel %vm49, %v67, 0.0
    %70 = vadd.xlane.f32.xlu0 %v69
    %v71 = vpop.xlane.xlu0 %70
    %v72 = vsel %vm49, %v68, 0.0
    %73 = vadd.xlane.f32.xlu0 %v72
    %v74 = vpop.xlane.xlu0 %73
    %v75 = vrcp.pop 31.0
    %v76 = vmul.f32 31.0, %v75
    %v77 = vsub.f32 1.0, %v76
    %v78 = vmul.f32 %v75, %v77
    %v79 = vadd.f32 %v75, %v78
    %vm80 = vweird.f32 %v75
    %v81 = vsel %vm80, %v75, %v79
    %v82 = vmul.f32 %v71, %v81
    %v83 = vmul.f32 %v74, %v81
    %v84 = vrsqrt.pop %v82
    %v85 = vmul.f32 %v84, %v82
    %v86 = vmul.f32 %v85, %v84
    %v87 = vmul.f32 0.5, %v86
    %v88 = vsub.f32 1.5, %v87
    %v89 = vmul.f32 %v84, %v88
    %v90 = vmul.f32 %v82, %v89
    %vm91 = vcmp.eq.f32.partialorder %v82, inf
    %v92 = vsel %vm91, %v82, %v90
    %vm93 = vcmp.eq.f32.partialorder %v82, 0.0
    %v94 = vand.u32 %v82, 2147483648
    %v95 = vsel %vm93, %v94, %v92
    %v96 = vrsqrt.pop %v83
    %v97 = vmul.f32 %v96, %v83
    %v98 = vmul.f32 %v97, %v96
    %v99 = vmul.f32 0.5, %v98
    %v100 = vsub.f32 1.5, %v99
    %v101 = vmul.f32 %v96, %v100
    %v102 = vmul.f32 %v83, %v101
    %vm103 = vcmp.eq.f32.partialorder %v83, inf
    %v104 = vsel %vm103, %v83, %v102
    %vm105 = vcmp.eq.f32.partialorder %v83, 0.0
    %v106 = vand.u32 %v83, 2147483648
    %v107 = vsel %vm105, %v106, %v104
    %v108 = vadd.f32 %v95, 1e-05
    %v109 = vadd.f32 %v107, 1e-05
    %v110 = vrcp.pop %v108
    %v111 = vmul.f32 %v108, %v110
    %v112 = vsub.f32 1.0, %v111
    %v113 = vmul.f32 %v110, %v112
    %v114 = vadd.f32 %v110, %v113
    %vm115 = vweird.f32 %v108
    %vm116 = vweird.f32 %v110
    %vm117 = vmor %vm115, %vm116
    %v118 = vsel %vm117, %v110, %v114
    %v119 = vand.u32 2147483647, %v108
    %vm120 = vcmp.eq.f32.partialorder %v119, 8.507059e+37
    %v121 = vand.u32 %v108, 2147483648
    %v122 = vor.u32 1.1754944e-38, %v121
    %v123 = vsel %vm120, %v122, %v118
    %v124 = vmul.f32 1.0, %v123
    %v125 = vrcp.pop %v109
    %v126 = vmul.f32 %v109, %v125
    %v127 = vsub.f32 1.0, %v126
    %v128 = vmul.f32 %v125, %v127
    %v129 = vadd.f32 %v125, %v128
    %vm130 = vweird.f32 %v109
    %vm131 = vweird.f32 %v125
    %vm132 = vmor %vm130, %vm131
    %v133 = vsel %vm132, %v125, %v129
    %v134 = vand.u32 2147483647, %v109
    %vm135 = vcmp.eq.f32.partialorder %v134, 8.507059e+37
    %v136 = vand.u32 %v109, 2147483648
    %v137 = vor.u32 1.1754944e-38, %v136
    %v138 = vsel %vm135, %v137, %v133
    %v139 = vmul.f32 1.0, %v138
    %v140 = vmul.f32 %v65, %v124
    %v141 = vmul.f32 %v66, %v139
    %v143 = vperm.slane %v47, 0
    %v145 = vmul.f32 %v140, %v143
    %v146 = vmul.f32 %v141, %v143
    %v148 = vperm.slane %v48, 0
    %v150 = vadd.f32 %v145, %v148
    %v151 = vadd.f32 %v146, %v148
    %152 = vst.msk [vmem:[#allocation7] sm:$0xff] %vm49, %v150
    %153 = vst.msk [vmem:[#allocation7 + $0x8] sm:$0xff] %vm49, %v151
    // Predicated region
    $region22: #{tpu_custom_call.1} parent=1 // pred_check
      _
    $region23: #{tpu_custom_call.1} parent=1 // pred_check_branch
      %155 = sbr.rel (0) target = $region25
    $region24: #{tpu_custom_call.1} parent=1 // pred_region
      %157 = vsyncadd [#allocation4], 0
      %s158 = sshll.u32 [#allocation7], 4
      %s159 = int_to_ptr.vmem [resolvable:$true] %s158
      %s160 = sshll.u32 %s3, 4
      %s161 = int_to_ptr.hbm [resolvable:$true] %s160
      %166 = dma.vmem_to_hbm [thread:$0]  %s159, 256, %s161, [#allocation4], 128, 128, 8
    $region25: #{tpu_custom_call.1} parent=1 // pred_fallthru
      _
    // Predicated region
    $region26: #{tpu_custom_call.1} parent=1 // pred_check
      _
    $region27: #{tpu_custom_call.1} parent=1 // pred_check_branch
      %168 = sbr.rel (0) target = $region29
    $region28: #{tpu_custom_call.1} parent=1 // pred_region
      %170 = dma.done [#allocation4], 256
    $region29: #{tpu_custom_call.1} parent=1 // pred_fallthru
      _
    %171 = vsyncpa [#allocation3], 1
    %172 = vsyncpa [#allocation6], 1
    %173 = vsyncpa [#allocation4], 1

</llo_original>
